<compile_context>
chip_gen: v5e
topology: v5e:2x2
jax: 0.10.0
libtpu: 0.0.40
codegen_flags: <defaults>
</compile_context>

<pallas_src>
import numpy as np
import jax
import jax.numpy as jnp
from jax.experimental import pallas as pl
from jax.experimental.pallas import tpu as pltpu


def _round_up(x, m):
    return ((x + m - 1) // m) * m


def _build_band(L, L_out, kernel_size, stride, pad):
    """(L_out, L) pooling-band matrix that also encodes the edge replication."""
    rows = np.broadcast_to(np.arange(L_out)[:, None], (L_out, kernel_size))
    cols = np.clip(
        np.arange(L_out)[:, None] * stride - pad + np.arange(kernel_size)[None, :],
        0, L - 1)
    A = np.zeros((L_out, L), dtype=np.float32)
    np.add.at(A, (rows, cols), 1.0 / float(kernel_size))
    return A


def _pool_matmul_kernel(a_ref, x_ref, o_ref, acc_ref):
    """Tiled matmul with f32 accumulator; K (contraction) is grid axis 2."""
    @pl.when(pl.program_id(2) == 0)
    def _():
        acc_ref[...] = jnp.zeros_like(acc_ref)

    acc_ref[...] += jnp.dot(a_ref[...], x_ref[...],
                            preferred_element_type=jnp.float32)

    @pl.when(pl.program_id(2) == pl.num_programs(2) - 1)
    def _():
        o_ref[...] = acc_ref[...].astype(o_ref.dtype)


def moving_avg_forward(x, kernel_size, stride):
    """x: (B, L, C) -> (B, L_out, C), matching the PyTorch moving_avg block."""
    B, L, C = x.shape
    dtype = x.dtype
    pad = (kernel_size - 1) // 2
    L_pad = L + 2 * pad
    L_out = (L_pad - kernel_size) // stride + 1
    N = B * C

    # Pooling band (absorbs edge replication, 1/k scaling and the stride).
    # TODO(synk): for extremely long sequences (L >> 10k) build the band
    # per-K-tile via scalar prefetch instead of materializing (L_out, L).
    A_np = _build_band(L, L_out, kernel_size, stride, pad)

    # ---- tile selection: biggest blocks under ~11 MiB per-step working set ----
    TM_MAX, TK_MAX, TN_MAX = 512, 1024, 512
    tm = L_out if L_out <= TM_MAX else TM_MAX            # output rows (sublanes)
    tk = L if L <= TK_MAX else TK_MAX                     # contraction (seq)
    tn = N if N <= TN_MAX else TN_MAX                     # lanes (B*C)
    Mp = L_out if tm == L_out else _round_up(L_out, tm)
    Kp = L if tk == L else _round_up(L, tk)
    Np = N if tn == N else _round_up(N, tn)
    # Every tiled (non-full) dim above is a multiple of 8 / 128, so the
    # (8,128) BlockSpec constraint is satisfied without partial tiles.

    if (Mp, Kp) != (L_out, L):
        A_full = np.zeros((Mp, Kp), dtype=np.float32)
        A_full[:L_out, :L] = A_np
        A_np = A_full
    A = jnp.asarray(A_np, dtype=dtype)

    # Lane-dense input slab (L, B*C); wrapper-side transpose is layout plumbing.
    xt = jnp.transpose(x, (1, 0, 2)).reshape(L, N)
    if (Kp, Np) != (L, N):
        xt = jnp.pad(xt, ((0, Kp - L), (0, Np - N)))

    grid = (Mp // tm, Np // tn, Kp // tk)

    out2d = pl.pallas_call(
        _pool_matmul_kernel,
        out_shape=jax.ShapeDtypeStruct((Mp, Np), dtype),
        grid_spec=pltpu.PrefetchScalarGridSpec(
            num_scalar_prefetch=0,
            grid=grid,
            in_specs=[
                pl.BlockSpec((tm, tk), lambda i, j, k: (i, k)),   # band tile
                pl.BlockSpec((tk, tn), lambda i, j, k: (k, j)),   # x tile
            ],
            out_specs=pl.BlockSpec((tm, tn), lambda i, j, k: (i, j)),
            scratch_shapes=[pltpu.VMEM((tm, tn), jnp.float32)],
        ),
        compiler_params=pltpu.CompilerParams(
            dimension_semantics=("parallel", "parallel", "arbitrary")),
    )(A, xt)

    out2d = out2d[:L_out, :N]
    return out2d.reshape(L_out, B, C).transpose(1, 0, 2)


# ---------------------------------------------------------------------------
# Pure-JAX reference mirroring the PyTorch module exactly
# ---------------------------------------------------------------------------
def ref_moving_avg(x, kernel_size, stride):
    pad = (kernel_size - 1) // 2
    front = jnp.repeat(x[:, 0:1, :], pad, axis=1)
    end = jnp.repeat(x[:, -1:, :], pad, axis=1)
    xp = jnp.concatenate([front, x, end], axis=1)
    L_pad = xp.shape[1]
    L_out = (L_pad - kernel_size) // stride + 1
    outs = [jnp.mean(xp[:, t * stride:t * stride + kernel_size, :], axis=1)
            for t in range(L_out)]
    return jnp.stack(outs, axis=1)


# ---------------------------------------------------------------------------
if __name__ == "__main__":
    # Small shapes consistent with the module: (batch, seq, channels)
    B, L, C = 2, 16, 8
    key = jax.random.PRNGKey(0)
    x = jax.random.normal(key, (B, L, C), dtype=jnp.float32)

    for kernel_size, stride in [(5, 1), (4, 2)]:
        out = jax.block_until_ready(moving_avg_forward(x, kernel_size, stride))
        ref = ref_moving_avg(x, kernel_size, stride)
        np.testing.assert_allclose(np.asarray(out), np.asarray(ref),
                                   rtol=1e-5, atol=1e-5)
        pad = (kernel_size - 1) // 2
        L_out = (L + 2 * pad - kernel_size) // stride + 1
        assert out.shape == (B, L_out, C)

    print("KERNEL_OK")
</pallas_src>

<mosaic_0001>
module attributes {stable_mosaic.version = 11 : i64} {
  func.func @_pool_matmul_kernel(%arg0: i32, %arg1: i32, %arg2: i32, %arg3: memref<16x16xf32, #tpu.memory_space<vmem>>, %arg4: memref<16x16xf32, #tpu.memory_space<vmem>>, %arg5: memref<16x16xf32, #tpu.memory_space<vmem>>, %arg6: memref<16x16xf32, #tpu.memory_space<vmem>>) attributes {dimension_semantics = [#tpu.dimension_semantics<parallel>, #tpu.dimension_semantics<parallel>, #tpu.dimension_semantics<arbitrary>], iteration_bounds = array<i64: 1, 1, 1>, scalar_prefetch = 0 : i64, scratch_operands = 1 : i64, tpu.core_type = #tpu.core_type<tc>, window_params = [{transform_indices = @transform_0, window_bounds = array<i64: 16, 16>}, {transform_indices = @transform_1, window_bounds = array<i64: 16, 16>}, {transform_indices = @transform_2, window_bounds = array<i64: 16, 16>}]} {
    %c0_i32 = arith.constant 0 : i32
    %0 = arith.cmpi eq, %arg2, %c0_i32 : i32
    %1 = arith.extui %0 : i1 to i32
    %c0_i32_0 = arith.constant 0 : i32
    %2 = arith.cmpi ne, %1, %c0_i32_0 : i32
    scf.if %2 {
      %cst_10 = arith.constant 0.000000e+00 : f32
      %12 = vector.broadcast %cst_10 : f32 to vector<16x16xf32>
      %c0_11 = arith.constant 0 : index
      %c0_12 = arith.constant 0 : index
      %13 = vector.load %arg6[%c0_11, %c0_12] : memref<16x16xf32, #tpu.memory_space<vmem>>, vector<16x16xf32>
      tpu.vector_store %arg6[%c0_11, %c0_12], %12 {strides = array<i32>} : memref<16x16xf32, #tpu.memory_space<vmem>>, vector<16x16xf32>,
    } else {
    }
    %c0 = arith.constant 0 : index
    %c0_1 = arith.constant 0 : index
    %3 = vector.load %arg6[%c0, %c0_1] : memref<16x16xf32, #tpu.memory_space<vmem>>, vector<16x16xf32>
    %c0_2 = arith.constant 0 : index
    %c0_3 = arith.constant 0 : index
    %4 = vector.load %arg3[%c0_2, %c0_3] : memref<16x16xf32, #tpu.memory_space<vmem>>, vector<16x16xf32>
    %c0_4 = arith.constant 0 : index
    %c0_5 = arith.constant 0 : index
    %5 = vector.load %arg4[%c0_4, %c0_5] : memref<16x16xf32, #tpu.memory_space<vmem>>, vector<16x16xf32>
    %cst = arith.constant dense<0.000000e+00> : vector<16x16xf32>
    %6 = tpu.matmul %4, %5, %cst {dimension_numbers = #tpu.dot_dimension_numbers<[1], [0], [0], [1], [0, 0, 1, 1], [], []>} : vector<16x16xf32>, vector<16x16xf32>, vector<16x16xf32> -> vector<16x16xf32>
    %7 = arith.addf %3, %6 : vector<16x16xf32>
    %c0_6 = arith.constant 0 : index
    %c0_7 = arith.constant 0 : index
    %8 = vector.load %arg6[%c0_6, %c0_7] : memref<16x16xf32, #tpu.memory_space<vmem>>, vector<16x16xf32>
    tpu.vector_store %arg6[%c0_6, %c0_7], %7 {strides = array<i32>} : memref<16x16xf32, #tpu.memory_space<vmem>>, vector<16x16xf32>,
    %c0_i32_8 = arith.constant 0 : i32
    %9 = arith.cmpi eq, %arg2, %c0_i32_8 : i32
    %10 = arith.extui %9 : i1 to i32
    %c0_i32_9 = arith.constant 0 : i32
    %11 = arith.cmpi ne, %10, %c0_i32_9 : i32
    scf.if %11 {
      %c0_10 = arith.constant 0 : index
      %c0_11 = arith.constant 0 : index
      %12 = vector.load %arg6[%c0_10, %c0_11] : memref<16x16xf32, #tpu.memory_space<vmem>>, vector<16x16xf32>
      %c0_12 = arith.constant 0 : index
      %c0_13 = arith.constant 0 : index
      %13 = vector.load %arg5[%c0_12, %c0_13] : memref<16x16xf32, #tpu.memory_space<vmem>>, vector<16x16xf32>
      tpu.vector_store %arg5[%c0_12, %c0_13], %12 {strides = array<i32>} : memref<16x16xf32, #tpu.memory_space<vmem>>, vector<16x16xf32>,
    } else {
    }
    return
  }
  func.func @transform_0(%arg0: i32, %arg1: i32, %arg2: i32) -> (i32, i32) {
    %c0_i32 = arith.constant 0 : i32
    return %arg0, %arg2 : i32, i32
  }
  func.func @transform_1(%arg0: i32, %arg1: i32, %arg2: i32) -> (i32, i32) {
    %c0_i32 = arith.constant 0 : i32
    return %arg2, %arg1 : i32, i32
  }
  func.func @transform_2(%arg0: i32, %arg1: i32, %arg2: i32) -> (i32, i32) {
    %c0_i32 = arith.constant 0 : i32
    return %arg0, %arg1 : i32, i32
  }
}

</mosaic_0001>

<llo_original>
// kernel: tpu_custom_call.1
$region0: #{tpu_custom_call.1}
  #allocation0 [shape = 'u32[]', space=smem, size = 0x4, offset = 0x4, fixed_abs, tag = 'smem constant byte address 0x4 - core index']
  #allocation1 [shape = 'u32[72,128]{1,0:T(1,128)}', space=vmem, size = 0x9000, scoped, tag = 'internal scratch']
  #allocation2 [shape = 'f32[16,16]{1,0:T(8,128)}', space=vmem, size = 0x2000, scoped, tag = 'scratch operand']
  %s0 = inlined_call_operand.hbm [shape: f32[16,16], index: 0, kind: input, shape index: {}]
  %s1 = inlined_call_operand.hbm [shape: f32[16,16], index: 1, kind: input, shape index: {}]
  %s2 = inlined_call_operand.hbm [shape: f32[16,16], index: 2, kind: output, shape index: {}]
  %s3 = sld [smem:[#allocation0]]
  $region34: #{tpu_custom_call.1} parent=0
    _
  %s5 = ssub.s32 1, %s3
  %s6 = scalar_select 0, %s5, %s3
  $region1: #{tpu_custom_call.1} parent=0
    #allocation3 [shape = 'u8[8192]{0}', space=vmem, size = 0x2000, scoped, tag = 'input window, operand 0, single buffered']
    #allocation4 [shape = 's32[1]{0}', space=sflag, size = 0x4, scoped, tag = 'scoped memory for tpu_custom_call.1']
    #allocation5 [shape = 's32[1]{0}', space=sflag, size = 0x4, scoped, tag = 'scoped memory for tpu_custom_call.1']
    #allocation6 [shape = 'u8[8192]{0}', space=vmem, size = 0x2000, scoped, tag = 'input window, operand 1, single buffered']
    #allocation7 [shape = 's32[1]{0}', space=sflag, size = 0x4, scoped, tag = 'scoped memory for tpu_custom_call.1']
    #allocation8 [shape = 'u8[8192]{0}', space=vmem, size = 0x2000, scoped, tag = 'output window, operand 0, single buffered']
    %7 = vsyncpa [#allocation4], 0
    %8 = vsyncpa [#allocation7], 0
    %9 = vsyncpa [#allocation5], 0
    // Predicated region
    $region2: #{tpu_custom_call.1} parent=1 // pred_check
      _
    $region3: #{tpu_custom_call.1} parent=1 // pred_check_branch
      %11 = sbr.rel (0) target = $region5
    $region4: #{tpu_custom_call.1} parent=1 // pred_region
      %13 = vsyncadd [#allocation4], 0
      %s14 = sshll.u32 %s0, 4
      %s15 = int_to_ptr.hbm [resolvable:$true] %s14
      %s16 = sshll.u32 [#allocation3], 4
      %s17 = int_to_ptr.vmem [resolvable:$true] %s16
      %22 = dma.hbm_to_vmem [thread:$0]  %s15, 256, %s17, [#allocation4], 128, 128, 8
    $region5: #{tpu_custom_call.1} parent=1 // pred_fallthru
      _
    // Predicated region
    $region6: #{tpu_custom_call.1} parent=1 // pred_check
      _
    $region7: #{tpu_custom_call.1} parent=1 // pred_check_branch
      %24 = sbr.rel (0) target = $region9
    $region8: #{tpu_custom_call.1} parent=1 // pred_region
      %26 = vsyncadd [#allocation7], 0
      %s27 = sshll.u32 %s1, 4
      %s28 = int_to_ptr.hbm [resolvable:$true] %s27
      %s29 = sshll.u32 [#allocation6], 4
      %s30 = int_to_ptr.vmem [resolvable:$true] %s29
      %35 = dma.hbm_to_vmem [thread:$0]  %s28, 256, %s30, [#allocation7], 128, 128, 8
    $region9: #{tpu_custom_call.1} parent=1 // pred_fallthru
      _
    // Predicated region
    $region10: #{tpu_custom_call.1} parent=1 // pred_check
      _
    $region11: #{tpu_custom_call.1} parent=1 // pred_check_branch
      %37 = sbr.rel (0) target = $region13
    $region12: #{tpu_custom_call.1} parent=1 // pred_region
      %39 = dma.done [#allocation4], 256
    $region13: #{tpu_custom_call.1} parent=1 // pred_fallthru
      _
    // Predicated region
    $region14: #{tpu_custom_call.1} parent=1 // pred_check
      _
    $region15: #{tpu_custom_call.1} parent=1 // pred_check_branch
      %41 = sbr.rel (0) target = $region17
    $region16: #{tpu_custom_call.1} parent=1 // pred_region
      %43 = dma.done [#allocation7], 256
    $region17: #{tpu_custom_call.1} parent=1 // pred_fallthru
      _
    %p44 = scmp.eq.s32.totalorder 0, 0
    // Predicated region
    $region18: #{tpu_custom_call.1} parent=1 // pred_check
      %p45 = pneg %p44
    $region19: #{tpu_custom_call.1} parent=1 // pred_check_branch
      %47 = sbr.rel (%p45) target = $region21
    $region20: #{tpu_custom_call.1} parent=1 // pred_region
      %vm48 = vcmask 130048
      %49 = vst.msk [vmem:[#allocation2] sm:$0xff] %vm48, 0.0
      %50 = vst.msk [vmem:[#allocation2 + $0x8] sm:$0xff] %vm48, 0.0
    $region21: #{tpu_custom_call.1} parent=1 // pred_fallthru
      _
    %v51 = vld [vmem:[#allocation2] sm:$0xff]
    %v52 = vld [vmem:[#allocation2 + $0x8] sm:$0xff]
    %v53 = vld [vmem:[#allocation3] sm:$0xff]
    %v54 = vld [vmem:[#allocation3 + $0x8] sm:$0xff]
    %v55 = vld [vmem:[#allocation6] sm:$0xff]
    %v56 = vld [vmem:[#allocation6 + $0x8] sm:$0xff]
    %vm57 = vcmask 130048
    %v59 = vsel %vm57, %v53, 0
    %v62 = vsel %vm57, %v54, 0
    %64 = vmatpush.msra.mxu0 0.0
    %65 = vmatpush.msra.mxu0 0.0
    %66 = vmatpush.msra.mxu0 0.0
    %67 = vmatpush.msra.mxu0 0.0
    %68 = vmatpush.msra.mxu0 0.0
    %69 = vmatpush.msra.mxu0 0.0
    %70 = vmatpush.msra.mxu0 0.0
    %71 = vmatpush.msra.mxu0 0.0
    %72 = vmatpush.msra.mxu0 0.0
    %73 = vmatpush.msra.mxu0 0.0
    %74 = vmatpush.msra.mxu0 0.0
    %75 = vmatpush.msra.mxu0 0.0
    %76 = vmatpush.msra.mxu0 0.0
    %77 = vmatpush.msra.mxu0 0.0
    %78 = vmatpush.msra.mxu0 %v56
    %79 = vmatpush.msra.mxu0 %v55
    %80 = vmatmul.f32.gmra.mxu0 %v59
    %v81 = vpop.f32.mrf.mxu0
    %v82 = vadd.f32 0.0, %v81
    %83 = vmatmul.f32.gmra.mxu0 %v62
    %v84 = vpop.f32.mrf.mxu0
    %v85 = vadd.f32 0.0, %v84
    %86 = vdwg.mxu0
    %v87 = vadd.f32 %v51, %v82
    %v88 = vadd.f32 %v52, %v85
    %89 = vst.msk [vmem:[#allocation2] sm:$0xff] %vm57, %v87
    %90 = vst.msk [vmem:[#allocation2 + $0x8] sm:$0xff] %vm57, %v88
    // Predicated region
    $region22: #{tpu_custom_call.1} parent=1 // pred_check
      %p91 = pneg %p44
    $region23: #{tpu_custom_call.1} parent=1 // pred_check_branch
      %93 = sbr.rel (%p91) target = $region25
    $region24: #{tpu_custom_call.1} parent=1 // pred_region
      %v94 = vld [vmem:[#allocation2] sm:$0xff]
      %v95 = vld [vmem:[#allocation2 + $0x8] sm:$0xff]
      %96 = vst.msk [vmem:[#allocation8] sm:$0xff] %vm57, %v94
      %97 = vst.msk [vmem:[#allocation8 + $0x8] sm:$0xff] %vm57, %v95
    $region25: #{tpu_custom_call.1} parent=1 // pred_fallthru
      _
    // Predicated region
    $region26: #{tpu_custom_call.1} parent=1 // pred_check
      _
    $region27: #{tpu_custom_call.1} parent=1 // pred_check_branch
      %99 = sbr.rel (0) target = $region29
    $region28: #{tpu_custom_call.1} parent=1 // pred_region
      %101 = vsyncadd [#allocation5], 0
      %s102 = sshll.u32 [#allocation8], 4
      %s103 = int_to_ptr.vmem [resolvable:$true] %s102
      %s104 = sshll.u32 %s2, 4
      %s105 = int_to_ptr.hbm [resolvable:$true] %s104
      %110 = dma.vmem_to_hbm [thread:$0]  %s103, 256, %s105, [#allocation5], 128, 128, 8
    $region29: #{tpu_custom_call.1} parent=1 // pred_fallthru
      _
    // Predicated region
    $region30: #{tpu_custom_call.1} parent=1 // pred_check
      _
    $region31: #{tpu_custom_call.1} parent=1 // pred_check_branch
      %112 = sbr.rel (0) target = $region33
    $region32: #{tpu_custom_call.1} parent=1 // pred_region
      %114 = dma.done [#allocation5], 256
    $region33: #{tpu_custom_call.1} parent=1 // pred_fallthru
      _
    %115 = vsyncpa [#allocation4], 1
    %116 = vsyncpa [#allocation7], 1
    %117 = vsyncpa [#allocation5], 1

</llo_original>
